<compile_context>
chip_gen: v6e
topology: v6e:2x2x1
jax: 0.10.0
libtpu: 0.0.40
codegen_flags: <defaults>
</compile_context>

<pallas_src>
import functools

import jax
import jax.numpy as jnp
import numpy as np
from jax.experimental import pallas as pl
from jax.experimental.pallas import tpu as pltpu


LEAKY_ALPHA = 0.2


def gan_disc_kernel(xs_ref, w1_ref, b1_ref, w2t_ref, gram_ref, out_ref,
                    h_acc_ref, *, inv_feat_dim):
    """Accumulate h = x @ W1 over feature tiles; at the last tile emit, per
    row, the discriminator score (minus b2, which cancels in the relativistic
    difference) and mean_i (dD/dx_i)^2 via the W1^T W1 Gram matrix."""
    fi = pl.program_id(1)

    @pl.when(fi == 0)
    def _init():
        h_acc_ref[...] = jnp.zeros_like(h_acc_ref)

    # Single stacked (rows, Ftile) @ (Ftile, HID) MXU matmul covers real+gen.
    h_acc_ref[...] += jnp.dot(xs_ref[...], w1_ref[...],
                              preferred_element_type=jnp.float32)

    @pl.when(fi == pl.num_programs(1) - 1)
    def _finalize():
        h = h_acc_ref[...] + b1_ref[...]                    # (rows, HID)
        w2t = w2t_ref[...]                                  # (1, HID)

        # layer 2 as VPU multiply + lane reduce (avoids an N=1 MXU matmul).
        a = jnp.where(h > 0, h, LEAKY_ALPHA * h)
        pred = jnp.sum(a * w2t, axis=-1, keepdims=True)     # (rows, 1)

        # dD/dx = (leaky'(h) * w2) @ W1^T  =>  ||dD/dx||^2 = s G s^T,
        # with s = leaky'(h) * w2 and G = W1^T W1 (precomputed).
        s = jnp.where(h > 0, 1.0, LEAKY_ALPHA) * w2t        # (rows, HID)
        q = jnp.dot(s, gram_ref[...], preferred_element_type=jnp.float32)
        gsq = jnp.sum(q * s, axis=-1, keepdims=True) * inv_feat_dim

        # Lane-dense packed output: lane 0 = pred, lane 1 = mean grad^2.
        lane = jax.lax.broadcasted_iota(jnp.int32, out_ref.shape, 1)
        out_ref[...] = jnp.where(lane == 0, pred,
                                 jnp.where(lane == 1, gsq, 0.0))


def make_discriminator_params(feat_dim, hidden_dim, key):
    k1, k2, k3, k4 = jax.random.split(key, 4)
    w1 = jax.random.normal(k1, (feat_dim, hidden_dim), jnp.float32) * 0.02
    b1 = jax.random.normal(k2, (hidden_dim,), jnp.float32) * 0.01
    w2 = jax.random.normal(k3, (hidden_dim, 1), jnp.float32) * 0.05
    b2 = jax.random.normal(k4, (), jnp.float32) * 0.01
    return w1, b1, w2, b2


def _pick_tile(dim, candidates):
    for c in candidates:
        if dim % c == 0:
            return c
    return dim  # fall back to the full (untiled) dimension


def relativistic_gan_loss(gen_samples, real_samples, params, lambda_gp=1.0):
    """Fused Pallas forward for RelativisticGANLoss (training, average=False)."""
    B = gen_samples.shape[0]
    feat = int(np.prod(gen_samples.shape[1:]))
    xr = real_samples.reshape(B, feat).astype(jnp.float32)
    xg = gen_samples.reshape(B, feat).astype(jnp.float32)
    w1, b1, w2, _b2 = params              # b2 cancels in D(real)-D(gen): unused
    hid = w1.shape[1]

    # One-time weight prep (outside the kernel, pure layout/algebra):
    #  - Gram matrix replaces the (rows,HID)x(HID,F) gradient matmuls
    #  - W2 as a (1,HID) row avoids an in-kernel transpose / skinny matmul
    gram = jnp.dot(w1.T, w1, precision=jax.lax.Precision.HIGHEST)
    b1_row = b1.reshape(1, hid)
    w2_row = w2.reshape(1, hid)

    # Stack real and generated samples along rows: one discriminator pass.
    xs = jnp.concatenate([xr, xg], axis=0)                  # (2B, F)
    rows = 2 * B

    f_tile = _pick_tile(feat, (512, 256, 128))              # reduction tile
    r_tile = 128 if (rows > 128 and rows % 128 == 0) else rows
    grid = (rows // r_tile, feat // f_tile)

    kernel = functools.partial(gan_disc_kernel, inv_feat_dim=1.0 / feat)
    out = pl.pallas_call(
        kernel,
        out_shape=jax.ShapeDtypeStruct((rows, 128), jnp.float32),
        grid_spec=pltpu.PrefetchScalarGridSpec(
            num_scalar_prefetch=0,
            grid=grid,
            in_specs=[
                pl.BlockSpec((r_tile, f_tile), lambda ri, fi: (ri, fi)),  # xs
                pl.BlockSpec((f_tile, hid), lambda ri, fi: (fi, 0)),      # W1
                pl.BlockSpec((1, hid), lambda ri, fi: (0, 0)),            # b1
                pl.BlockSpec((1, hid), lambda ri, fi: (0, 0)),            # W2^T
                pl.BlockSpec((hid, hid), lambda ri, fi: (0, 0)),          # Gram
            ],
            out_specs=pl.BlockSpec((r_tile, 128), lambda ri, fi: (ri, 0)),
            scratch_shapes=[pltpu.VMEM((r_tile, hid), jnp.float32)],
        ),
        compiler_params=pltpu.CompilerParams(
            dimension_semantics=("parallel", "arbitrary"),
            vmem_limit_bytes=32 * 1024 * 1024,
        ),
    )(xs, w1, b1_row, w2_row, gram)

    pred = out[:, 0]                       # D(x) - b2; rows = [real ; gen]
    gsq = out[:, 1]                        # mean_i (dD/dx_i)^2 per row
    d = pred[:B] - pred[B:]                # D(real) - D(gen)   (b2 cancels)

    # torch.add(generator_loss, discriminator_loss): matching keys summed.
    adversarial = jax.nn.softplus(-d) + jax.nn.softplus(d)
    gradient_penalty = 0.5 * lambda_gp * (gsq[:B] + gsq[B:])
    return {"adversarial": adversarial, "gradient_penalty": gradient_penalty}


def _reference_jax(gen_samples, real_samples, params, lambda_gp=1.0):
    """Pure-JAX reference (autodiff gradient penalty) for correctness checks."""
    B = gen_samples.shape[0]
    feat = int(np.prod(gen_samples.shape[1:]))
    xr = real_samples.reshape(B, feat).astype(jnp.float32)
    xg = gen_samples.reshape(B, feat).astype(jnp.float32)
    w1, b1, w2, b2 = params

    def disc(x):
        h = jnp.dot(x, w1) + b1
        a = jnp.where(h > 0, h, LEAKY_ALPHA * h)
        return jnp.sum(a * w2[:, 0], axis=-1) + b2

    pr, pg = disc(xr), disc(xg)
    advd = jax.nn.softplus(-(pr - pg))
    advg = jax.nn.softplus(-(pg - pr))

    def gp_term(x):
        g = jax.grad(lambda s: jnp.sum(disc(s)))(x)          # (B, F)
        return jnp.mean(g * g, axis=1)

    gp = 0.5 * lambda_gp * (gp_term(xr) + gp_term(xg))
    return {"adversarial": advd + advg, "gradient_penalty": gp}


if __name__ == "__main__":
    key = jax.random.PRNGKey(0)
    k_gen, k_real, k_disc = jax.random.split(key, 3)

    B, C, H, W = 2, 4, 16, 16            # NCHW, matches PyTorch convention
    HID = 128
    gen_samples = jax.random.normal(k_gen, (B, C, H, W), jnp.float32)
    real_samples = jax.random.normal(k_real, (B, C, H, W), jnp.float32)
    params = make_discriminator_params(C * H * W, HID, k_disc)

    out = relativistic_gan_loss(gen_samples, real_samples, params,
                                lambda_gp=1.0)
    out = jax.tree_util.tree_map(jax.block_until_ready, out)

    ref = _reference_jax(gen_samples, real_samples, params, lambda_gp=1.0)
    np.testing.assert_allclose(np.asarray(out["adversarial"]),
                               np.asarray(ref["adversarial"]),
                               rtol=2e-5, atol=1e-5)
    np.testing.assert_allclose(np.asarray(out["gradient_penalty"]),
                               np.asarray(ref["gradient_penalty"]),
                               rtol=2e-5, atol=1e-5)

    print("KERNEL_OK")
</pallas_src>

<mosaic_0001>
module attributes {stable_mosaic.version = 11 : i64} {
  func.func @gan_disc_kernel(%arg0: i32, %arg1: i32, %arg2: memref<4x512xf32, #tpu.memory_space<vmem>>, %arg3: memref<512x128xf32, #tpu.memory_space<vmem>>, %arg4: memref<1x128xf32, #tpu.memory_space<vmem>>, %arg5: memref<1x128xf32, #tpu.memory_space<vmem>>, %arg6: memref<128x128xf32, #tpu.memory_space<vmem>>, %arg7: memref<4x128xf32, #tpu.memory_space<vmem>>, %arg8: memref<4x128xf32, #tpu.memory_space<vmem>>) attributes {dimension_semantics = [#tpu.dimension_semantics<parallel>, #tpu.dimension_semantics<arbitrary>], iteration_bounds = array<i64: 1, 2>, scalar_prefetch = 0 : i64, scratch_operands = 1 : i64, tpu.core_type = #tpu.core_type<tc>, window_params = [{transform_indices = @transform_0, window_bounds = array<i64: 4, 512>}, {transform_indices = @transform_1, window_bounds = array<i64: 512, 128>}, {pipeline_mode = #tpu.pipeline_mode<synchronous>, transform_indices = @transform_2, window_bounds = array<i64: 1, 128>}, {pipeline_mode = #tpu.pipeline_mode<synchronous>, transform_indices = @transform_3, window_bounds = array<i64: 1, 128>}, {pipeline_mode = #tpu.pipeline_mode<synchronous>, transform_indices = @transform_4, window_bounds = array<i64: 128, 128>}, {transform_indices = @transform_5, window_bounds = array<i64: 4, 128>}]} {
    %c0_i32 = arith.constant 0 : i32
    %0 = arith.cmpi eq, %arg1, %c0_i32 : i32
    %1 = arith.extui %0 : i1 to i32
    %c0_i32_0 = arith.constant 0 : i32
    %2 = arith.cmpi ne, %1, %c0_i32_0 : i32
    scf.if %2 {
      %cst_9 = arith.constant 0.000000e+00 : f32
      %12 = vector.broadcast %cst_9 : f32 to vector<4x128xf32>
      %c0_10 = arith.constant 0 : index
      %c0_11 = arith.constant 0 : index
      %13 = vector.load %arg8[%c0_10, %c0_11] : memref<4x128xf32, #tpu.memory_space<vmem>>, vector<4x128xf32>
      tpu.vector_store %arg8[%c0_10, %c0_11], %12 {strides = array<i32>} : memref<4x128xf32, #tpu.memory_space<vmem>>, vector<4x128xf32>,
    } else {
    }
    %c0 = arith.constant 0 : index
    %c0_1 = arith.constant 0 : index
    %3 = vector.load %arg8[%c0, %c0_1] : memref<4x128xf32, #tpu.memory_space<vmem>>, vector<4x128xf32>
    %c0_2 = arith.constant 0 : index
    %c0_3 = arith.constant 0 : index
    %4 = vector.load %arg2[%c0_2, %c0_3] : memref<4x512xf32, #tpu.memory_space<vmem>>, vector<4x512xf32>
    %c0_4 = arith.constant 0 : index
    %c0_5 = arith.constant 0 : index
    %5 = vector.load %arg3[%c0_4, %c0_5] : memref<512x128xf32, #tpu.memory_space<vmem>>, vector<512x128xf32>
    %cst = arith.constant dense<0.000000e+00> : vector<4x128xf32>
    %6 = tpu.matmul %4, %5, %cst {dimension_numbers = #tpu.dot_dimension_numbers<[1], [0], [0], [1], [0, 0, 1, 1], [], []>} : vector<4x512xf32>, vector<512x128xf32>, vector<4x128xf32> -> vector<4x128xf32>
    %7 = arith.addf %3, %6 : vector<4x128xf32>
    %c0_6 = arith.constant 0 : index
    %c0_7 = arith.constant 0 : index
    %8 = vector.load %arg8[%c0_6, %c0_7] : memref<4x128xf32, #tpu.memory_space<vmem>>, vector<4x128xf32>
    tpu.vector_store %arg8[%c0_6, %c0_7], %7 {strides = array<i32>} : memref<4x128xf32, #tpu.memory_space<vmem>>, vector<4x128xf32>,
    %c1_i32 = arith.constant 1 : i32
    %9 = arith.cmpi eq, %arg1, %c1_i32 : i32
    %10 = arith.extui %9 : i1 to i32
    %c0_i32_8 = arith.constant 0 : i32
    %11 = arith.cmpi ne, %10, %c0_i32_8 : i32
    scf.if %11 {
      %c0_9 = arith.constant 0 : index
      %c0_10 = arith.constant 0 : index
      %12 = vector.load %arg8[%c0_9, %c0_10] : memref<4x128xf32, #tpu.memory_space<vmem>>, vector<4x128xf32>
      %c0_11 = arith.constant 0 : index
      %c0_12 = arith.constant 0 : index
      %13 = vector.load %arg4[%c0_11, %c0_12] : memref<1x128xf32, #tpu.memory_space<vmem>>, vector<1x128xf32>
      %14 = vector.broadcast %13 : vector<1x128xf32> to vector<4x128xf32>
      %15 = arith.addf %12, %14 : vector<4x128xf32>
      %c0_13 = arith.constant 0 : index
      %c0_14 = arith.constant 0 : index
      %16 = vector.load %arg5[%c0_13, %c0_14] : memref<1x128xf32, #tpu.memory_space<vmem>>, vector<1x128xf32>
      %cst_15 = arith.constant 0.000000e+00 : f32
      %17 = vector.broadcast %cst_15 : f32 to vector<4x128xf32>
      %18 = arith.cmpf ogt, %15, %17 : vector<4x128xf32>
      %cst_16 = arith.constant 2.000000e-01 : f32
      %19 = vector.broadcast %cst_16 : f32 to vector<4x128xf32>
      %20 = arith.mulf %19, %15 : vector<4x128xf32>
      %21 = arith.select %18, %15, %20 : vector<4x128xi1>, vector<4x128xf32>
      %22 = vector.broadcast %16 : vector<1x128xf32> to vector<4x128xf32>
      %23 = arith.mulf %21, %22 : vector<4x128xf32>
      %cst_17 = arith.constant dense<0.000000e+00> : vector<4xf32>
      %24 = vector.multi_reduction <add>, %23, %cst_17 [1] : vector<4x128xf32> to vector<4xf32>
      %25 = vector.shape_cast %24 : vector<4xf32> to vector<4x1xf32>
      %cst_18 = arith.constant 0.000000e+00 : f32
      %26 = vector.broadcast %cst_18 : f32 to vector<4x128xf32>
      %27 = arith.cmpf ogt, %15, %26 : vector<4x128xf32>
      %cst_19 = arith.constant 1.000000e+00 : f32
      %cst_20 = arith.constant 2.000000e-01 : f32
      %28 = vector.broadcast %cst_19 : f32 to vector<4x128xf32>
      %29 = vector.broadcast %cst_20 : f32 to vector<4x128xf32>
      %30 = arith.select %27, %28, %29 : vector<4x128xi1>, vector<4x128xf32>
      %31 = vector.broadcast %16 : vector<1x128xf32> to vector<4x128xf32>
      %32 = arith.mulf %30, %31 : vector<4x128xf32>
      %c0_21 = arith.constant 0 : index
      %c0_22 = arith.constant 0 : index
      %33 = vector.load %arg6[%c0_21, %c0_22] : memref<128x128xf32, #tpu.memory_space<vmem>>, vector<128x128xf32>
      %cst_23 = arith.constant dense<0.000000e+00> : vector<4x128xf32>
      %34 = tpu.matmul %32, %33, %cst_23 {dimension_numbers = #tpu.dot_dimension_numbers<[1], [0], [0], [1], [0, 0, 1, 1], [], []>} : vector<4x128xf32>, vector<128x128xf32>, vector<4x128xf32> -> vector<4x128xf32>
      %35 = arith.mulf %34, %32 : vector<4x128xf32>
      %cst_24 = arith.constant dense<0.000000e+00> : vector<4xf32>
      %36 = vector.multi_reduction <add>, %35, %cst_24 [1] : vector<4x128xf32> to vector<4xf32>
      %37 = vector.shape_cast %36 : vector<4xf32> to vector<4x1xf32>
      %cst_25 = arith.constant 9.765625E-4 : f32
      %38 = vector.broadcast %cst_25 : f32 to vector<4x1xf32>
      %39 = arith.mulf %37, %38 : vector<4x1xf32>
      %40 = tpu.iota {dimensions = array<i32: 1>} : vector<4x128xi32>
      %c0_i32_26 = arith.constant 0 : i32
      %41 = vector.broadcast %c0_i32_26 : i32 to vector<4x128xi32>
      %42 = arith.cmpi eq, %40, %41 : vector<4x128xi32>
      %c1_i32_27 = arith.constant 1 : i32
      %43 = vector.broadcast %c1_i32_27 : i32 to vector<4x128xi32>
      %44 = arith.cmpi eq, %40, %43 : vector<4x128xi32>
      %cst_28 = arith.constant 0.000000e+00 : f32
      %45 = vector.shape_cast %39 : vector<4x1xf32> to vector<4x1xf32>
      %46 = vector.broadcast %45 : vector<4x1xf32> to vector<4x128xf32>
      %47 = vector.broadcast %cst_28 : f32 to vector<4x128xf32>
      %48 = arith.select %44, %46, %47 : vector<4x128xi1>, vector<4x128xf32>
      %49 = vector.shape_cast %25 : vector<4x1xf32> to vector<4x1xf32>
      %50 = vector.broadcast %49 : vector<4x1xf32> to vector<4x128xf32>
      %51 = arith.select %42, %50, %48 : vector<4x128xi1>, vector<4x128xf32>
      %c0_29 = arith.constant 0 : index
      %c0_30 = arith.constant 0 : index
      %52 = vector.load %arg7[%c0_29, %c0_30] : memref<4x128xf32, #tpu.memory_space<vmem>>, vector<4x128xf32>
      tpu.vector_store %arg7[%c0_29, %c0_30], %51 {strides = array<i32>} : memref<4x128xf32, #tpu.memory_space<vmem>>, vector<4x128xf32>,
    } else {
    }
    return
  }
  func.func @transform_0(%arg0: i32, %arg1: i32) -> (i32, i32) {
    %c0_i32 = arith.constant 0 : i32
    return %arg0, %arg1 : i32, i32
  }
  func.func @transform_1(%arg0: i32, %arg1: i32) -> (i32, i32) {
    %c0_i32 = arith.constant 0 : i32
    %c0_i32_0 = arith.constant 0 : i32
    return %arg1, %c0_i32 : i32, i32
  }
  func.func @transform_2(%arg0: i32, %arg1: i32) -> (i32, i32) {
    %c0_i32 = arith.constant 0 : i32
    %c0_i32_0 = arith.constant 0 : i32
    %c0_i32_1 = arith.constant 0 : i32
    return %c0_i32, %c0_i32_0 : i32, i32
  }
  func.func @transform_3(%arg0: i32, %arg1: i32) -> (i32, i32) {
    %c0_i32 = arith.constant 0 : i32
    %c0_i32_0 = arith.constant 0 : i32
    %c0_i32_1 = arith.constant 0 : i32
    return %c0_i32, %c0_i32_0 : i32, i32
  }
  func.func @transform_4(%arg0: i32, %arg1: i32) -> (i32, i32) {
    %c0_i32 = arith.constant 0 : i32
    %c0_i32_0 = arith.constant 0 : i32
    %c0_i32_1 = arith.constant 0 : i32
    return %c0_i32, %c0_i32_0 : i32, i32
  }
  func.func @transform_5(%arg0: i32, %arg1: i32) -> (i32, i32) {
    %c0_i32 = arith.constant 0 : i32
    %c0_i32_0 = arith.constant 0 : i32
    return %arg0, %c0_i32 : i32, i32
  }
}

</mosaic_0001>

<llo_original>
// kernel: tpu_custom_call.1
$region0: #{tpu_custom_call.1}
  #allocation0 [shape = 'u32[]', space=smem, size = 0x4, offset = 0x4, fixed_abs, tag = 'smem constant byte address 0x4 - core index']
  #allocation1 [shape = 'u32[144,128]{1,0:T(1,128)}', space=vmem, size = 0x12000, scoped, tag = 'internal scratch']
  #allocation2 [shape = 'f32[4,128]{1,0:T(4,128)}', space=vmem, size = 0x800, scoped, tag = 'scratch operand']
  %s0 = inlined_call_operand.hbm [shape: f32[4,1024], index: 0, kind: input, shape index: {}]
  %s1 = inlined_call_operand.hbm [shape: f32[1024,128], index: 1, kind: input, shape index: {}]
  %s2 = inlined_call_operand.vmem [shape: f32[1,128], index: 2, kind: input, shape index: {}]
  %s3 = inlined_call_operand.vmem [shape: f32[1,128], index: 3, kind: input, shape index: {}]
  %s4 = inlined_call_operand.hbm [shape: f32[128,128], index: 4, kind: input, shape index: {}]
  %s5 = inlined_call_operand.hbm [shape: f32[4,128], index: 5, kind: output, shape index: {}]
  %s6 = sld [smem:[#allocation0]]
  $region73: #{tpu_custom_call.1} parent=0
    _
  %s8 = ssub.s32 1, %s6
  %s9 = scalar_select 0, %s8, %s6
  $region1: #{tpu_custom_call.1} parent=0
    #allocation3 [shape = 'u8[16384]{0}', space=vmem, size = 0x4000, scoped, tag = 'input window, operand 0']
    #allocation4 [shape = 's32[2]{0}', space=sflag, size = 0x8, scoped, tag = 'scoped memory for tpu_custom_call.1']
    #allocation5 [shape = 's32[2]{0}', space=sflag, size = 0x8, scoped, tag = 'scoped memory for tpu_custom_call.1']
    #allocation6 [shape = 'u8[524288]{0}', space=vmem, size = 0x80000, scoped, tag = 'input window, operand 1']
    #allocation7 [shape = 's32[2]{0}', space=sflag, size = 0x8, scoped, tag = 'scoped memory for tpu_custom_call.1']
    #allocation8 [shape = 'u8[65536]{0}', space=vmem, size = 0x10000, scoped, tag = 'input window, operand 4, single buffered']
    #allocation9 [shape = 'u8[2048]{0}', space=vmem, size = 0x800, scoped, tag = 'output window, operand 0, single buffered']
    %10 = vsyncpa [#allocation4], 0
    %s11 = scalar_lea.sflag [#allocation4], 1
    %12 = vsyncpa %s11, 0
    %13 = vsyncpa [#allocation7], 0
    %s14 = scalar_lea.sflag [#allocation7], 1
    %15 = vsyncpa %s14, 0
    %16 = vsyncpa [#allocation5], 0
    loop: start=0, step=1, limit=4
    $region2: #{tpu_custom_call.1} parent=1 // loop_pre_header
      _
    $region3: #{tpu_custom_call.1} parent=1 // loop_header
      %s18 = sphi 0, %s22
      %p19 = scmp.ge.s32.totalorder %s18, 4
      %s25 = sphi 0, %s37
      %s26 = sphi 0, %s33
      %s27 = sphi 0, %s25
      %s28 = sphi 0, %s26
      %s29 = sphi 0, %s27
      %s30 = sphi 0, %s28
      %s42 = sphi 0, %s44
      %s45 = sphi 0, %s42
      %s46 = sphi 0, %s45
      %s62 = sphi 0, %s46
      %s68 = sphi 0, %s70
      %s71 = sphi 0, %s68
      %s72 = sphi 0, %s71
      %s88 = sphi 0, %s72
      %s92 = sphi 0, %s92
      %s94 = sphi 0, %s92
      %s95 = sphi 0, %s94
      %s109 = sphi 0, %s95
      %s113 = sphi 0, %s113
      %s115 = sphi 0, %s113
      %s116 = sphi 0, %s115
      %s130 = sphi 0, %s116
      %s134 = sphi 0, %s134
      %s136 = sphi 0, %s134
      %s137 = sphi 0, %s136
      %s151 = sphi 0, %s137
      %s157 = sphi 0, %s159
      %s160 = sphi 0, %s157
      %s161 = sphi 0, %s160
      %s177 = sphi 0, %s161
    $region4: #{tpu_custom_call.1} parent=1 // loop_header_branch
      %21 = sbr.rel (%p19) target = $region8
    $region5: #{tpu_custom_call.1} parent=1 // loop_body
      %s23 = ssub.s32 %s18, 1
      %s24 = ssub.s32 %s18, 2
      %s31 = sadd.s32 1, %s26
      %p32 = scmp.ge.s32.totalorder %s31, 2
      %s33 = scalar_select %p32, 0, %s31
      %s34 = sadd.s32 1, %s25
      %s35 = scalar_select %p32, %s34, %s25
      %p36 = scmp.ge.s32.totalorder %s35, 1
      %s37 = scalar_select %p36, 0, %s35
      %s38 = ssub.s32 %s25, %s37
      %s39 = ssub.s32 %s26, %s33
      %s40 = sor.u32 %s38, %s39
      %p41 = scmp.eq.s32.totalorder %s40, 0
      %s43 = sadd.s32 %s42, 1
      %s44 = scalar_select %p41, %s42, %s43
      %p47 = pneg %p41
      %p48 = scmp.eq.s32.totalorder %s18, 1
      %p49 = por %p47, %p48
      %p50 = scmp.ne.s32.totalorder %s42, %s45
      %p51 = scmp.eq.s32.totalorder %s18, 0
      %p52 = por %p50, %p51
      %p53 = scmp.ne.s32.totalorder %s42, %s45
      %p54 = scmp.eq.s32.totalorder %s23, 1
      %p55 = por %p53, %p54
      %p56 = scmp.ne.s32.totalorder %s45, %s46
      %p57 = scmp.eq.s32.totalorder %s23, 0
      %p58 = por %p56, %p57
      %p59 = scmp.ne.s32.totalorder %s45, %s46
      %p60 = scmp.eq.s32.totalorder %s24, 1
      %p61 = por %p59, %p60
      %p63 = scmp.ne.s32.totalorder %s46, %s62
      %p64 = scmp.eq.s32.totalorder %s24, 0
      %p65 = por %p63, %p64
      %s66 = ssub.s32 %s26, %s33
      %p67 = scmp.eq.s32.totalorder %s66, 0
      %s69 = sadd.s32 %s68, 1
      %s70 = scalar_select %p67, %s68, %s69
      %p73 = pneg %p67
      %p74 = scmp.eq.s32.totalorder %s18, 1
      %p75 = por %p73, %p74
      %p76 = scmp.ne.s32.totalorder %s68, %s71
      %p77 = scmp.eq.s32.totalorder %s18, 0
      %p78 = por %p76, %p77
      %p79 = scmp.ne.s32.totalorder %s68, %s71
      %p80 = scmp.eq.s32.totalorder %s23, 1
      %p81 = por %p79, %p80
      %p82 = scmp.ne.s32.totalorder %s71, %s72
      %p83 = scmp.eq.s32.totalorder %s23, 0
      %p84 = por %p82, %p83
      %p85 = scmp.ne.s32.totalorder %s71, %s72
      %p86 = scmp.eq.s32.totalorder %s24, 1
      %p87 = por %p85, %p86
      %p89 = scmp.ne.s32.totalorder %s72, %s88
      %p90 = scmp.eq.s32.totalorder %s24, 0
      %p91 = por %p89, %p90
      %s93 = sadd.s32 %s92, 1
      %p96 = scmp.eq.s32.totalorder %s18, 1
      %p97 = scmp.ne.s32.totalorder %s92, %s94
      %p98 = scmp.eq.s32.totalorder %s18, 0
      %p99 = por %p97, %p98
      %p100 = scmp.ne.s32.totalorder %s92, %s94
      %p101 = scmp.eq.s32.totalorder %s23, 1
      %p102 = por %p100, %p101
      %p103 = scmp.ne.s32.totalorder %s94, %s95
      %p104 = scmp.eq.s32.totalorder %s23, 0
      %p105 = por %p103, %p104
      %p106 = scmp.ne.s32.totalorder %s94, %s95
      %p107 = scmp.eq.s32.totalorder %s24, 1
      %p108 = por %p106, %p107
      %p110 = scmp.ne.s32.totalorder %s95, %s109
      %p111 = scmp.eq.s32.totalorder %s24, 0
      %p112 = por %p110, %p111
      %s114 = sadd.s32 %s113, 1
      %p117 = scmp.eq.s32.totalorder %s18, 1
      %p118 = scmp.ne.s32.totalorder %s113, %s115
      %p119 = scmp.eq.s32.totalorder %s18, 0
      %p120 = por %p118, %p119
      %p121 = scmp.ne.s32.totalorder %s113, %s115
      %p122 = scmp.eq.s32.totalorder %s23, 1
      %p123 = por %p121, %p122
      %p124 = scmp.ne.s32.totalorder %s115, %s116
      %p125 = scmp.eq.s32.totalorder %s23, 0
      %p126 = por %p124, %p125
      %p127 = scmp.ne.s32.totalorder %s115, %s116
      %p128 = scmp.eq.s32.totalorder %s24, 1
      %p129 = por %p127, %p128
      %p131 = scmp.ne.s32.totalorder %s116, %s130
      %p132 = scmp.eq.s32.totalorder %s24, 0
      %p133 = por %p131, %p132
      %s135 = sadd.s32 %s134, 1
      %p138 = scmp.eq.s32.totalorder %s18, 1
      %p139 = scmp.ne.s32.totalorder %s134, %s136
      %p140 = scmp.eq.s32.totalorder %s18, 0
      %p141 = por %p139, %p140
      %p142 = scmp.ne.s32.totalorder %s134, %s136
      %p143 = scmp.eq.s32.totalorder %s23, 1
      %p144 = por %p142, %p143
      %p145 = scmp.ne.s32.totalorder %s136, %s137
      %p146 = scmp.eq.s32.totalorder %s23, 0
      %p147 = por %p145, %p146
      %p148 = scmp.ne.s32.totalorder %s136, %s137
      %p149 = scmp.eq.s32.totalorder %s24, 1
      %p150 = por %p148, %p149
      %p152 = scmp.ne.s32.totalorder %s137, %s151
      %p153 = scmp.eq.s32.totalorder %s24, 0
      %p154 = por %p152, %p153
      %s155 = ssub.s32 %s25, %s37
      %p156 = scmp.eq.s32.totalorder %s155, 0
      %s158 = sadd.s32 %s157, 1
      %s159 = scalar_select %p156, %s157, %s158
      %p162 = pneg %p156
      %p163 = scmp.eq.s32.totalorder %s18, 1
      %p164 = por %p162, %p163
      %p165 = scmp.ne.s32.totalorder %s157, %s160
      %p166 = scmp.eq.s32.totalorder %s18, 0
      %p167 = por %p165, %p166
      %p168 = scmp.ne.s32.totalorder %s157, %s160
      %p169 = scmp.eq.s32.totalorder %s23, 1
      %p170 = por %p168, %p169
      %p171 = scmp.ne.s32.totalorder %s160, %s161
      %p172 = scmp.eq.s32.totalorder %s23, 0
      %p173 = por %p171, %p172
      %p174 = scmp.ne.s32.totalorder %s160, %s161
      %p175 = scmp.eq.s32.totalorder %s24, 1
      %p176 = por %p174, %p175
      %p178 = scmp.ne.s32.totalorder %s161, %s177
      %p179 = scmp.eq.s32.totalorder %s24, 0
      %p180 = por %p178, %p179
      %p181 = scmp.le.s32.totalorder 1, %s18
      %p182 = scmp.lt.s32.totalorder %s18, 3
      %p183 = pnand %p181, %p182
      %p184 = pneg %p183
      // Predicated region
      $region9: #{tpu_custom_call.1} parent=5 // pred_check
        _
      $region10: #{tpu_custom_call.1} parent=5 // pred_check_branch
        %186 = sbr.rel (%p183) target = $region12
      $region11: #{tpu_custom_call.1} parent=5 // pred_region
        %s187 = ssub.s32 %s18, 1
        // Predicated region
        $region13: #{tpu_custom_call.1} parent=11 // pred_check
          %p188 = pneg %p105
        $region14: #{tpu_custom_call.1} parent=11 // pred_check_branch
          %190 = sbr.rel (%p188) target = $region16
        $region15: #{tpu_custom_call.1} parent=11 // pred_region
          _
        $region16: #{tpu_custom_call.1} parent=11 // pred_fallthru
          _
        // Predicated region
        $region17: #{tpu_custom_call.1} parent=11 // pred_check
          %p191 = pneg %p126
        $region18: #{tpu_custom_call.1} parent=11 // pred_check_branch
          %193 = sbr.rel (%p191) target = $region20
        $region19: #{tpu_custom_call.1} parent=11 // pred_region
          _
        $region20: #{tpu_custom_call.1} parent=11 // pred_fallthru
          _
        // Predicated region
        $region21: #{tpu_custom_call.1} parent=11 // pred_check
          %p194 = pneg %p147
        $region22: #{tpu_custom_call.1} parent=11 // pred_check_branch
          %196 = sbr.rel (%p194) target = $region24
        $region23: #{tpu_custom_call.1} parent=11 // pred_region
          %s198 = ssub.s32 2048, 2048
          %199 = vsyncadd [#allocation7], %s198
          %s200 = sshll.u32 [#allocation8], 4
          %s201 = int_to_ptr.vmem [resolvable:$true] %s200
          %206 = dma.hbm_to_vmem [thread:$0]  %s4, 2048, %s201, [#allocation7], 128, 128, 8
        $region24: #{tpu_custom_call.1} parent=11 // pred_fallthru
          _
      $region12: #{tpu_custom_call.1} parent=5 // pred_fallthru
        _
      %p207 = scmp.lt.s32.totalorder %s18, 2
      // Predicated region
      $region25: #{tpu_custom_call.1} parent=5 // pred_check
        %p208 = pneg %p207
      $region26: #{tpu_custom_call.1} parent=5 // pred_check_branch
        %210 = sbr.rel (%p208) target = $region28
      $region27: #{tpu_custom_call.1} parent=5 // pred_region
        // Predicated region
        $region29: #{tpu_custom_call.1} parent=27 // pred_check
          %p211 = pneg %p52
        $region30: #{tpu_custom_call.1} parent=27 // pred_check_branch
          %213 = sbr.rel (%p211) target = $region32
        $region31: #{tpu_custom_call.1} parent=27 // pred_region
          %s214 = sand.u32 %s42, 1
          %s215 = scalar_lea.sflag [#allocation4], %s214
          %s216 = sand.u32 %s42, 1
          %s217 = smul.addr %s216, 16
          %s218 = scalar_lea.vmem [#allocation3], %s217
          %s219 = smul.u32 4, %s26
          %s221 = ssub.s32 256, 256
          %222 = vsyncadd %s215, %s221
          %s223 = smul.addr %s25, 8
          %s224 = sadd.s32 %s219, %s223
          %s225 = smul.addr %s224, 64
          %s226 = scalar_lea.hbm %s0, %s225
          %s228 = sshll.u32 %s218, 4
          %s229 = int_to_ptr.vmem [resolvable:$true] %s228
          %231 = dma.hbm_to_vmem [thread:$0]  %s226, 256, %s229, %s215
        $region32: #{tpu_custom_call.1} parent=27 // pred_fallthru
          _
        // Predicated region
        $region33: #{tpu_custom_call.1} parent=27 // pred_check
          %p232 = pneg %p78
        $region34: #{tpu_custom_call.1} parent=27 // pred_check_branch
          %234 = sbr.rel (%p232) target = $region36
        $region35: #{tpu_custom_call.1} parent=27 // pred_region
          %s235 = sand.u32 %s18, 1
          %s236 = scalar_lea.sflag [#allocation7], %s235
          %s237 = sand.u32 %s68, 1
          %s238 = smul.addr %s237, 512
          %s239 = scalar_lea.vmem [#allocation6], %s238
          %s240 = smul.u32 64, %s26
          %s242 = ssub.s32 8192, 8192
          %243 = vsyncadd %s236, %s242
          %s244 = smul.addr %s240, 128
          %s245 = scalar_lea.hbm %s1, %s244
          %s246 = sshll.u32 %s239, 4
          %s247 = int_to_ptr.vmem [resolvable:$true] %s246
          %252 = dma.hbm_to_vmem [thread:$0]  %s245, 8192, %s247, %s236, 128, 128, 8
        $region36: #{tpu_custom_call.1} parent=27 // pred_fallthru
          _
      $region28: #{tpu_custom_call.1} parent=5 // pred_fallthru
        _
      %p253 = scmp.le.s32.totalorder 1, %s18
      %p254 = scmp.lt.s32.totalorder %s18, 3
      %p255 = pnand %p253, %p254
      %p256 = pneg %p255
      // Predicated region
      $region37: #{tpu_custom_call.1} parent=5 // pred_check
        _
      $region38: #{tpu_custom_call.1} parent=5 // pred_check_branch
        %258 = sbr.rel (%p255) target = $region40
      $region39: #{tpu_custom_call.1} parent=5 // pred_region
        %s259 = ssub.s32 %s18, 1
        %s260 = sand.u32 %s45, 1
        %s261 = scalar_lea.sflag [#allocation4], %s260
        %s262 = sand.u32 %s45, 1
        %s263 = smul.addr %s262, 16
        %s264 = scalar_lea.vmem [#allocation3], %s263
        // Predicated region
        $region41: #{tpu_custom_call.1} parent=39 // pred_check
          %p265 = pneg %p58
        $region42: #{tpu_custom_call.1} parent=39 // pred_check_branch
          %267 = sbr.rel (%p265) target = $region44
        $region43: #{tpu_custom_call.1} parent=39 // pred_region
          %268 = dma.done %s261, 256
        $region44: #{tpu_custom_call.1} parent=39 // pred_fallthru
          _
        %s269 = sand.u32 %s23, 1
        %s270 = scalar_lea.sflag [#allocation7], %s269
        %s271 = sand.u32 %s71, 1
        %s272 = smul.addr %s271, 512
        %s273 = scalar_lea.vmem [#allocation6], %s272
        // Predicated region
        $region45: #{tpu_custom_call.1} parent=39 // pred_check
          %p274 = pneg %p84
        $region46: #{tpu_custom_call.1} parent=39 // pred_check_branch
          %276 = sbr.rel (%p274) target = $region48
        $region47: #{tpu_custom_call.1} parent=39 // pred_region
          %277 = dma.done %s270, 8192
        $region48: #{tpu_custom_call.1} parent=39 // pred_fallthru
          _
        // Predicated region
        $region49: #{tpu_custom_call.1} parent=39 // pred_check
          %p278 = pneg %p147
        $region50: #{tpu_custom_call.1} parent=39 // pred_check_branch
          %280 = sbr.rel (%p278) target = $region52
        $region51: #{tpu_custom_call.1} parent=39 // pred_region
          %281 = dma.done [#allocation7], 2048
        $region52: #{tpu_custom_call.1} parent=39 // pred_fallthru
          _
        %s282 = sand.u32 %s45, 1
        %s283 = scalar_lea.sflag [#allocation4], %s282
        %s284 = sand.u32 %s45, 1
        %s285 = smul.addr %s284, 16
        %s286 = scalar_lea.vmem [#allocation3], %s285
        %p287 = pneg %p58
        %p288 = pneg %p55
        %s289 = sand.u32 %s23, 1
        %s290 = scalar_lea.sflag [#allocation7], %s289
        %s291 = sand.u32 %s71, 1
        %s292 = smul.addr %s291, 512
        %s293 = scalar_lea.vmem [#allocation6], %s292
        %p294 = pneg %p84
        %p295 = pneg %p81
        %p296 = pneg %p105
        %p297 = pneg %p102
        %p298 = pneg %p126
        %p299 = pneg %p123
        %p300 = pneg %p147
        %p301 = pneg %p144
        %p302 = pneg %p173
        %p303 = pneg %p170
        %s304 = smul.u32 4, %s28
        %s305 = smul.u32 64, %s28
        %p306 = scmp.eq.s32.totalorder %s28, 0
        // Predicated region
        $region53: #{tpu_custom_call.1} parent=39 // pred_check
          %p307 = pneg %p306
        $region54: #{tpu_custom_call.1} parent=39 // pred_check_branch
          %309 = sbr.rel (%p307) target = $region56
        $region55: #{tpu_custom_call.1} parent=39 // pred_region
          %310 = vst [vmem:[#allocation2] sm:$0xf] 0.0
        $region56: #{tpu_custom_call.1} parent=39 // pred_fallthru
          _
        %v311 = vld [vmem:[#allocation2] sm:$0xf]
        %v312 = vld [vmem:[%s264] sm:$0xff]
        %v313 = vld [vmem:[%s264 + $0x8] sm:$0xff]
        %v314 = vld [vmem:[%s273] sm:$0xff]
        %v315 = vld [vmem:[%s273 + $0x8] sm:$0xff]
        %v316 = vld [vmem:[%s273 + $0x10] sm:$0xff]
        %v317 = vld [vmem:[%s273 + $0x18] sm:$0xff]
        %v318 = vld [vmem:[%s273 + $0x20] sm:$0xff]
        %v319 = vld [vmem:[%s273 + $0x28] sm:$0xff]
        %v320 = vld [vmem:[%s273 + $0x30] sm:$0xff]
        %v321 = vld [vmem:[%s273 + $0x38] sm:$0xff]
        %v322 = vld [vmem:[%s273 + $0x40] sm:$0xff]
        %v323 = vld [vmem:[%s273 + $0x48] sm:$0xff]
        %v324 = vld [vmem:[%s273 + $0x50] sm:$0xff]
        %v325 = vld [vmem:[%s273 + $0x58] sm:$0xff]
        %v326 = vld [vmem:[%s273 + $0x60] sm:$0xff]
        %v327 = vld [vmem:[%s273 + $0x68] sm:$0xff]
        %v328 = vld [vmem:[%s273 + $0x70] sm:$0xff]
        %v329 = vld [vmem:[%s273 + $0x78] sm:$0xff]
        %v330 = vld [vmem:[%s273 + $0x80] sm:$0xff]
        %v331 = vld [vmem:[%s273 + $0x88] sm:$0xff]
        %v332 = vld [vmem:[%s273 + $0x90] sm:$0xff]
        %v333 = vld [vmem:[%s273 + $0x98] sm:$0xff]
        %v334 = vld [vmem:[%s273 + $0xa0] sm:$0xff]
        %v335 = vld [vmem:[%s273 + $0xa8] sm:$0xff]
        %v336 = vld [vmem:[%s273 + $0xb0] sm:$0xff]
        %v337 = vld [vmem:[%s273 + $0xb8] sm:$0xff]
        %v338 = vld [vmem:[%s273 + $0xc0] sm:$0xff]
        %v339 = vld [vmem:[%s273 + $0xc8] sm:$0xff]
        %v340 = vld [vmem:[%s273 + $0xd0] sm:$0xff]
        %v341 = vld [vmem:[%s273 + $0xd8] sm:$0xff]
        %v342 = vld [vmem:[%s273 + $0xe0] sm:$0xff]
        %v343 = vld [vmem:[%s273 + $0xe8] sm:$0xff]
        %v344 = vld [vmem:[%s273 + $0xf0] sm:$0xff]
        %v345 = vld [vmem:[%s273 + $0xf8] sm:$0xff]
        %v346 = vld [vmem:[%s273 + $0x100] sm:$0xff]
        %v347 = vld [vmem:[%s273 + $0x108] sm:$0xff]
        %v348 = vld [vmem:[%s273 + $0x110] sm:$0xff]
        %v349 = vld [vmem:[%s273 + $0x118] sm:$0xff]
        %v350 = vld [vmem:[%s273 + $0x120] sm:$0xff]
        %v351 = vld [vmem:[%s273 + $0x128] sm:$0xff]
        %v352 = vld [vmem:[%s273 + $0x130] sm:$0xff]
        %v353 = vld [vmem:[%s273 + $0x138] sm:$0xff]
        %v354 = vld [vmem:[%s273 + $0x140] sm:$0xff]
        %v355 = vld [vmem:[%s273 + $0x148] sm:$0xff]
        %v356 = vld [vmem:[%s273 + $0x150] sm:$0xff]
        %v357 = vld [vmem:[%s273 + $0x158] sm:$0xff]
        %v358 = vld [vmem:[%s273 + $0x160] sm:$0xff]
        %v359 = vld [vmem:[%s273 + $0x168] sm:$0xff]
        %v360 = vld [vmem:[%s273 + $0x170] sm:$0xff]
        %v361 = vld [vmem:[%s273 + $0x178] sm:$0xff]
        %v362 = vld [vmem:[%s273 + $0x180] sm:$0xff]
        %v363 = vld [vmem:[%s273 + $0x188] sm:$0xff]
        %v364 = vld [vmem:[%s273 + $0x190] sm:$0xff]
        %v365 = vld [vmem:[%s273 + $0x198] sm:$0xff]
        %v366 = vld [vmem:[%s273 + $0x1a0] sm:$0xff]
        %v367 = vld [vmem:[%s273 + $0x1a8] sm:$0xff]
        %v368 = vld [vmem:[%s273 + $0x1b0] sm:$0xff]
        %v369 = vld [vmem:[%s273 + $0x1b8] sm:$0xff]
        %v370 = vld [vmem:[%s273 + $0x1c0] sm:$0xff]
        %v371 = vld [vmem:[%s273 + $0x1c8] sm:$0xff]
        %v372 = vld [vmem:[%s273 + $0x1d0] sm:$0xff]
        %v373 = vld [vmem:[%s273 + $0x1d8] sm:$0xff]
        %v374 = vld [vmem:[%s273 + $0x1e0] sm:$0xff]
        %v375 = vld [vmem:[%s273 + $0x1e8] sm:$0xff]
        %v376 = vld [vmem:[%s273 + $0x1f0] sm:$0xff]
        %v377 = vld [vmem:[%s273 + $0x1f8] sm:$0xff]
        %v380 = vcombine.high %v312, %v312
        %v381 = vcombine.high %v313, %v313
        %384 = vmatprep.subr.mxu0 0.0
        %385 = vmatpush1.msra.mxu0 %v329
        %386 = vmatprep.subr.mxu0 0.0
        %387 = vmatpush1.msra.mxu0 %v328
        %388 = vmatprep.subr.mxu0 0.0
        %389 = vmatpush1.msra.mxu0 %v327
        %390 = vmatprep.subr.mxu0 0.0
        %391 = vmatpush1.msra.mxu0 %v326
        %392 = vmatprep.subr.mxu0 0.0
        %393 = vmatpush1.msra.mxu0 %v325
        %394 = vmatprep.subr.mxu0 0.0
        %395 = vmatpush1.msra.mxu0 %v324
        %396 = vmatprep.subr.mxu0 0.0
        %397 = vmatpush1.msra.mxu0 %v323
        %398 = vmatprep.subr.mxu0 0.0
        %399 = vmatpush1.msra.mxu0 %v322
        %400 = vmatprep.subr.mxu0 0.0
        %401 = vmatpush1.msra.mxu0 %v321
        %402 = vmatprep.subr.mxu0 0.0
        %403 = vmatpush1.msra.mxu0 %v320
        %404 = vmatprep.subr.mxu0 0.0
        %405 = vmatpush1.msra.mxu0 %v319
        %406 = vmatprep.subr.mxu0 0.0
        %407 = vmatpush1.msra.mxu0 %v318
        %408 = vmatprep.subr.mxu0 0.0
        %409 = vmatpush1.msra.mxu0 %v317
        %410 = vmatprep.subr.mxu0 0.0
        %411 = vmatpush1.msra.mxu0 %v316
        %412 = vmatprep.subr.mxu0 0.0
        %413 = vmatpush1.msra.mxu0 %v315
        %414 = vmatprep.subr.mxu0 0.0
        %415 = vmatpush1.msra.mxu0 %v314
        %416 = vmatprep.subr.mxu0 0.0
        %417 = vmatpush2.msra.mxu0 %v345
        %418 = vmatprep.subr.mxu0 0.0
        %419 = vmatpush2.msra.mxu0 %v344
        %420 = vmatprep.subr.mxu0 0.0
        %421 = vmatpush2.msra.mxu0 %v343
        %422 = vmatprep.subr.mxu0 0.0
        %423 = vmatpush2.msra.mxu0 %v342
        %424 = vmatprep.subr.mxu0 0.0
        %425 = vmatpush2.msra.mxu0 %v341
        %426 = vmatprep.subr.mxu0 0.0
        %427 = vmatpush2.msra.mxu0 %v340
        %428 = vmatprep.subr.mxu0 0.0
        %429 = vmatpush2.msra.mxu0 %v339
        %430 = vmatprep.subr.mxu0 0.0
        %431 = vmatpush2.msra.mxu0 %v338
        %432 = vmatprep.subr.mxu0 0.0
        %433 = vmatpush2.msra.mxu0 %v337
        %434 = vmatprep.subr.mxu0 0.0
        %435 = vmatpush2.msra.mxu0 %v336
        %436 = vmatprep.subr.mxu0 0.0
        %437 = vmatpush2.msra.mxu0 %v335
        %438 = vmatprep.subr.mxu0 0.0
        %439 = vmatpush2.msra.mxu0 %v334
        %440 = vmatprep.subr.mxu0 0.0
        %441 = vmatpush2.msra.mxu0 %v333
        %442 = vmatprep.subr.mxu0 0.0
        %443 = vmatpush2.msra.mxu0 %v332
        %444 = vmatprep.subr.mxu0 0.0
        %445 = vmatpush2.msra.mxu0 %v331
        %446 = vmatprep.subr.mxu0 0.0
        %447 = vmatpush2.msra.mxu0 %v330
        %448 = vmatprep.mubr.f32.mxu0 %v380
        %449 = vmatmul.mubr.f32.gmra.mxu0 %v312
        %v450 = vpop.f32.mrf.mxu0
        %v451 = vadd.f32 0.0, %v450
        %v452 = vpop.f32.mrf.mxu0
        %453 = vdwg.mxu0
        %454 = vmatprep.subr.mxu0 0.0
        %455 = vmatpush1.msra.mxu0 %v361
        %456 = vmatprep.subr.mxu0 0.0
        %457 = vmatpush1.msra.mxu0 %v360
        %458 = vmatprep.subr.mxu0 0.0
        %459 = vmatpush1.msra.mxu0 %v359
        %460 = vmatprep.subr.mxu0 0.0
        %461 = vmatpush1.msra.mxu0 %v358
        %462 = vmatprep.subr.mxu0 0.0
        %463 = vmatpush1.msra.mxu0 %v357
        %464 = vmatprep.subr.mxu0 0.0
        %465 = vmatpush1.msra.mxu0 %v356
        %466 = vmatprep.subr.mxu0 0.0
        %467 = vmatpush1.msra.mxu0 %v355
        %468 = vmatprep.subr.mxu0 0.0
        %469 = vmatpush1.msra.mxu0 %v354
        %470 = vmatprep.subr.mxu0 0.0
        %471 = vmatpush1.msra.mxu0 %v353
        %472 = vmatprep.subr.mxu0 0.0
        %473 = vmatpush1.msra.mxu0 %v352
        %474 = vmatprep.subr.mxu0 0.0
        %475 = vmatpush1.msra.mxu0 %v351
        %476 = vmatprep.subr.mxu0 0.0
        %477 = vmatpush1.msra.mxu0 %v350
        %478 = vmatprep.subr.mxu0 0.0
        %479 = vmatpush1.msra.mxu0 %v349
        %480 = vmatprep.subr.mxu0 0.0
        %481 = vmatpush1.msra.mxu0 %v348
        %482 = vmatprep.subr.mxu0 0.0
        %483 = vmatpush1.msra.mxu0 %v347
        %484 = vmatprep.subr.mxu0 0.0
        %485 = vmatpush1.msra.mxu0 %v346
        %486 = vmatprep.subr.mxu0 0.0
        %487 = vmatpush2.msra.mxu0 %v377
        %488 = vmatprep.subr.mxu0 0.0
        %489 = vmatpush2.msra.mxu0 %v376
        %490 = vmatprep.subr.mxu0 0.0
        %491 = vmatpush2.msra.mxu0 %v375
        %492 = vmatprep.subr.mxu0 0.0
        %493 = vmatpush2.msra.mxu0 %v374
        %494 = vmatprep.subr.mxu0 0.0
        %495 = vmatpush2.msra.mxu0 %v373
        %496 = vmatprep.subr.mxu0 0.0
        %497 = vmatpush2.msra.mxu0 %v372
        %498 = vmatprep.subr.mxu0 0.0
        %499 = vmatpush2.msra.mxu0 %v371
        %500 = vmatprep.subr.mxu0 0.0
        %501 = vmatpush2.msra.mxu0 %v370
        %502 = vmatprep.subr.mxu0 0.0
        %503 = vmatpush2.msra.mxu0 %v369
        %504 = vmatprep.subr.mxu0 0.0
        %505 = vmatpush2.msra.mxu0 %v368
        %506 = vmatprep.subr.mxu0 0.0
        %507 = vmatpush2.msra.mxu0 %v367
        %508 = vmatprep.subr.mxu0 0.0
        %509 = vmatpush2.msra.mxu0 %v366
        %510 = vmatprep.subr.mxu0 0.0
        %511 = vmatpush2.msra.mxu0 %v365
        %512 = vmatprep.subr.mxu0 0.0
        %513 = vmatpush2.msra.mxu0 %v364
        %514 = vmatprep.subr.mxu0 0.0
        %515 = vmatpush2.msra.mxu0 %v363
        %516 = vmatprep.subr.mxu0 0.0
        %517 = vmatpush2.msra.mxu0 %v362
        %518 = vmatprep.mubr.f32.mxu0 %v381
        %519 = vmatmul.mubr.f32.gmra.mxu0 %v313
        %v520 = vpop.f32.mrf.mxu0
        %v521 = vadd.f32 %v451, %v520
        %v522 = vpop.f32.mrf.mxu0
        %523 = vdwg.mxu0
        %v524 = vadd.f32 %v311, %v521
        %525 = vst [vmem:[#allocation2] sm:$0xf] %v524
        %p526 = scmp.eq.s32.totalorder %s28, 1
        // Predicated region
        $region57: #{tpu_custom_call.1} parent=39 // pred_check
          %p527 = pneg %p526
        $region58: #{tpu_custom_call.1} parent=39 // pred_check_branch
          %529 = sbr.rel (%p527) target = $region60
        $region59: #{tpu_custom_call.1} parent=39 // pred_region
          %v530 = vld [vmem:[#allocation2] sm:$0xf]
          %v531 = vld [vmem:[%s2] sm:$0x1]
          %v533 = vlaneseq
          %v534 = vshrl.u32 %v533, 7
          %v535 = vsub.s32 0, %v534
          %v536 = vrot.slane %v531, %v535
          %v538 = vadd.f32 %v530, %v536
          %v539 = vld [vmem:[%s3] sm:$0x1]
          %vm540 = vcmp.gt.f32.partialorder %v538, 0.0
          %v541 = vmul.f32 %v538, 0.2
          %v542 = vsel %vm540, %v538, %v541
          %v544 = vlaneseq
          %v545 = vshrl.u32 %v544, 7
          %v546 = vsub.s32 0, %v545
          %v547 = vrot.slane %v539, %v546
          %v549 = vmul.f32 %v542, %v547
          %vm550 = vcmask 1043456
          %v551 = vsel %vm550, %v549, 0.0
          %552 = vadd.xlane.f32.xlu0 %v551
          %v553 = vpop.xlane.xlu0 %552
          %v554 = vsel %vm540, 1.0, 0.2
          %v555 = vmul.f32 %v554, %v547
          %v556 = vld [vmem:[#allocation8] sm:$0xff]
          %v557 = vld [vmem:[#allocation8 + $0x8] sm:$0xff]
          %v558 = vld [vmem:[#allocation8 + $0x10] sm:$0xff]
          %v559 = vld [vmem:[#allocation8 + $0x18] sm:$0xff]
          %v560 = vld [vmem:[#allocation8 + $0x20] sm:$0xff]
          %v561 = vld [vmem:[#allocation8 + $0x28] sm:$0xff]
          %v562 = vld [vmem:[#allocation8 + $0x30] sm:$0xff]
          %v563 = vld [vmem:[#allocation8 + $0x38] sm:$0xff]
          %v564 = vld [vmem:[#allocation8 + $0x40] sm:$0xff]
          %v565 = vld [vmem:[#allocation8 + $0x48] sm:$0xff]
          %v566 = vld [vmem:[#allocation8 + $0x50] sm:$0xff]
          %v567 = vld [vmem:[#allocation8 + $0x58] sm:$0xff]
          %v568 = vld [vmem:[#allocation8 + $0x60] sm:$0xff]
          %v569 = vld [vmem:[#allocation8 + $0x68] sm:$0xff]
          %v570 = vld [vmem:[#allocation8 + $0x70] sm:$0xff]
          %v571 = vld [vmem:[#allocation8 + $0x78] sm:$0xff]
          %572 = vmatprep.subr.mxu0 0.0
          %573 = vmatpush1.msra.mxu0 %v571
          %574 = vmatprep.subr.mxu0 0.0
          %575 = vmatpush1.msra.mxu0 %v570
          %576 = vmatprep.subr.mxu0 0.0
          %577 = vmatpush1.msra.mxu0 %v569
          %578 = vmatprep.subr.mxu0 0.0
          %579 = vmatpush1.msra.mxu0 %v568
          %580 = vmatprep.subr.mxu0 0.0
          %581 = vmatpush1.msra.mxu0 %v567
          %582 = vmatprep.subr.mxu0 0.0
          %583 = vmatpush1.msra.mxu0 %v566
          %584 = vmatprep.subr.mxu0 0.0
          %585 = vmatpush1.msra.mxu0 %v565
          %586 = vmatprep.subr.mxu0 0.0
          %587 = vmatpush1.msra.mxu0 %v564
          %588 = vmatprep.subr.mxu0 0.0
          %589 = vmatpush1.msra.mxu0 %v563
          %590 = vmatprep.subr.mxu0 0.0
          %591 = vmatpush1.msra.mxu0 %v562
          %592 = vmatprep.subr.mxu0 0.0
          %593 = vmatpush1.msra.mxu0 %v561
          %594 = vmatprep.subr.mxu0 0.0
          %595 = vmatpush1.msra.mxu0 %v560
          %596 = vmatprep.subr.mxu0 0.0
          %597 = vmatpush1.msra.mxu0 %v559
          %598 = vmatprep.subr.mxu0 0.0
          %599 = vmatpush1.msra.mxu0 %v558
          %600 = vmatprep.subr.mxu0 0.0
          %601 = vmatpush1.msra.mxu0 %v557
          %602 = vmatprep.subr.mxu0 0.0
          %603 = vmatpush1.msra.mxu0 %v556
          %604 = vmatprep.subr.mxu0 0.0
          %605 = vmatpush2.msra.mxu0 0.0
          %606 = vmatprep.subr.mxu0 0.0
          %607 = vmatpush2.msra.mxu0 0.0
          %608 = vmatprep.subr.mxu0 0.0
          %609 = vmatpush2.msra.mxu0 0.0
          %610 = vmatprep.subr.mxu0 0.0
          %611 = vmatpush2.msra.mxu0 0.0
          %612 = vmatprep.subr.mxu0 0.0
          %613 = vmatpush2.msra.mxu0 0.0
          %614 = vmatprep.subr.mxu0 0.0
          %615 = vmatpush2.msra.mxu0 0.0
          %616 = vmatprep.subr.mxu0 0.0
          %617 = vmatpush2.msra.mxu0 0.0
          %618 = vmatprep.subr.mxu0 0.0
          %619 = vmatpush2.msra.mxu0 0.0
          %620 = vmatprep.subr.mxu0 0.0
          %621 = vmatpush2.msra.mxu0 0.0
          %622 = vmatprep.subr.mxu0 0.0
          %623 = vmatpush2.msra.mxu0 0.0
          %624 = vmatprep.subr.mxu0 0.0
          %625 = vmatpush2.msra.mxu0 0.0
          %626 = vmatprep.subr.mxu0 0.0
          %627 = vmatpush2.msra.mxu0 0.0
          %628 = vmatprep.subr.mxu0 0.0
          %629 = vmatpush2.msra.mxu0 0.0
          %630 = vmatprep.subr.mxu0 0.0
          %631 = vmatpush2.msra.mxu0 0.0
          %632 = vmatprep.subr.mxu0 0.0
          %633 = vmatpush2.msra.mxu0 0.0
          %634 = vmatprep.subr.mxu0 0.0
          %635 = vmatpush2.msra.mxu0 0.0
          %636 = vmatprep.mubr.f32.mxu0 0.0
          %637 = vmatmul.mubr.f32.gmra.mxu0 %v555
          %v638 = vpop.f32.mrf.mxu0
          %v639 = vadd.f32 0.0, %v638
          %v640 = vpop.f32.mrf.mxu0
          %641 = vdwg.mxu0
          %v642 = vmul.f32 %v639, %v555
          %v643 = vsel %vm550, %v642, 0.0
          %644 = vadd.xlane.f32.xlu0 %v643
          %v645 = vpop.xlane.xlu0 %644
          %v646 = vmul.f32 %v645, 0.0009765625
          %v647 = vlaneseq
          %v648 = vand.u32 %v647, 127
          %vm649 = vcmp.eq.s32.totalorder %v648, 0
          %vm650 = vcmp.eq.s32.totalorder %v648, 1
          %v651 = vsel %vm650, %v646, 0.0
          %v652 = vsel %vm649, %v553, %v651
          %653 = vst [vmem:[#allocation9] sm:$0xf] %v652
        $region60: #{tpu_custom_call.1} parent=39 // pred_fallthru
          _
        // Predicated region
        $region61: #{tpu_custom_call.1} parent=39 // pred_check
          %p654 = pneg %p170
        $region62: #{tpu_custom_call.1} parent=39 // pred_check_branch
          %656 = sbr.rel (%p654) target = $region64
        $region63: #{tpu_custom_call.1} parent=39 // pred_region
          %s658 = ssub.s32 64, 64
          %659 = vsyncadd [#allocation5], %s658
          %s660 = smul.addr %s27, 64
          %s661 = scalar_lea.hbm %s5, %s660
          %s663 = sshll.u32 [#allocation9], 4
          %s664 = int_to_ptr.vmem [resolvable:$true] %s663
          %666 = dma.vmem_to_hbm [thread:$0]  %s664, 64, %s661, [#allocation5]
        $region64: #{tpu_custom_call.1} parent=39 // pred_fallthru
          _
        // Predicated region
        $region65: #{tpu_custom_call.1} parent=39 // pred_check
          %p667 = pneg %p170
        $region66: #{tpu_custom_call.1} parent=39 // pred_check_branch
          %669 = sbr.rel (%p667) target = $region68
        $region67: #{tpu_custom_call.1} parent=39 // pred_region
          %670 = dma.done [#allocation5], 64
        $region68: #{tpu_custom_call.1} parent=39 // pred_fallthru
          _
      $region40: #{tpu_custom_call.1} parent=5 // pred_fallthru
        _
      %p671 = scmp.le.s32.totalorder 2, %s18
      // Predicated region
      $region69: #{tpu_custom_call.1} parent=5 // pred_check
        %p672 = pneg %p671
      $region70: #{tpu_custom_call.1} parent=5 // pred_check_branch
        %674 = sbr.rel (%p672) target = $region72
      $region71: #{tpu_custom_call.1} parent=5 // pred_region
        %s675 = ssub.s32 %s18, 2
      $region72: #{tpu_custom_call.1} parent=5 // pred_fallthru
        _
    $region6: #{tpu_custom_call.1} parent=1 // loop_footer
      %s22 = sadd.s32 1, %s18
    $region7: #{tpu_custom_call.1} parent=1 // loop_footer_branch
      %17 = sbr.rel target = $region3
    $region8: #{tpu_custom_call.1} parent=1 // loop_exit
      _
    %676 = vsyncpa [#allocation4], 1
    %s677 = scalar_lea.sflag [#allocation4], 1
    %678 = vsyncpa %s677, 1
    %679 = vsyncpa [#allocation7], 1
    %s680 = scalar_lea.sflag [#allocation7], 1
    %681 = vsyncpa %s680, 1
    %682 = vsyncpa [#allocation5], 1
    %s683 = scalar_lea.sflag [#allocation5], 1
    %684 = vsyncpa %s683, 1

</llo_original>
